<compile_context>
chip_gen: v7x
topology: tpu7x:2x2x1
jax: 0.10.0
libtpu: 0.0.40
codegen_flags: <defaults>
</compile_context>

<pallas_src>
import jax
import jax.numpy as jnp
from jax.experimental import pallas as pl
from jax.experimental.pallas import tpu as pltpu


def _projector_kernel(x_ref, w_ref, b_ref, o_ref):
    # x_ref: [TM, K] (stored dtype), w_ref: [K, P] bf16, b_ref: [1, P] f32,
    # o_ref: [TM, P] out_dtype.
    # Cast x to bf16 in-kernel instead of a separate wrapper-side XLA pass
    # (that pass was a full HBM read+write of the activation tensor).
    x = x_ref[...].astype(jnp.bfloat16)
    acc = jnp.dot(x, w_ref[...], preferred_element_type=jnp.float32)
    acc = acc + b_ref[...]          # f32 bias, broadcast over rows
    o_ref[...] = acc.astype(o_ref.dtype)


def _round_up(x, m):
    return ((x + m - 1) // m) * m


def paligemma_multimodal_projector(image_features, weight, bias, *,
                                   tm=None, out_dtype=jnp.bfloat16):
    """Linear projection: [B, N, K] @ [K, P] + [P] -> [B, N, P].

    weight is expected pre-cast to bf16 and bias to f32 (hoist the one-time
    parameter casts out of the per-call path); other dtypes are cast here as a
    fallback.  Output defaults to bf16 (downstream Gemma layers consume bf16);
    pass out_dtype=jnp.float32 for f32-fidelity writeback.
    """
    B, N, K = image_features.shape
    Kw, P = weight.shape
    assert Kw == K, "weight must be [vision_hidden_size, projection_dim]"
    M = B * N

    # Feed x in its stored dtype; no pad -> Pallas masks the ragged last tile
    # (only the store masking guards correctness; garbage rows are never kept).
    x2d = image_features.reshape(M, K)
    if weight.dtype != jnp.bfloat16:
        weight = weight.astype(jnp.bfloat16)   # fallback; prefer hoisting
    b2d = bias.reshape(1, P)
    if b2d.dtype != jnp.float32:
        b2d = b2d.astype(jnp.float32)

    # M tile: 512 amortizes the ~0.35us per-step pipeline overhead and, with a
    # single-buffered weight + bf16 output, fits v5e's 16 MiB default scoped
    # VMEM (and comfortably v6e/v7x).  Small-M fallback keeps the tile a
    # multiple of 16 (bf16 sublane packing) / 128 (MXU row block).
    if tm is None:
        if M >= 512:
            tm = 512
        elif M >= 128:
            tm = _round_up(M, 128)
        else:
            tm = _round_up(M, 16)
    n_tiles = pl.cdiv(M, tm)

    x_bytes = jnp.dtype(x2d.dtype).itemsize
    out_bytes = jnp.dtype(out_dtype).itemsize
    cost = pl.CostEstimate(
        flops=2 * M * K * P,
        transcendentals=0,
        bytes_accessed=M * K * x_bytes + K * P * 2 + P * 4 + M * P * out_bytes,
    )

    out2d = pl.pallas_call(
        _projector_kernel,
        out_shape=jax.ShapeDtypeStruct((M, P), out_dtype),
        grid_spec=pltpu.PrefetchScalarGridSpec(
            num_scalar_prefetch=0,
            grid=(n_tiles,),
            in_specs=[
                # x tile: default double-buffering so its DMA hides under MXU.
                pl.BlockSpec((tm, K), lambda i: (i, 0)),
                # weight / bias: constant block index -> DMA'd once, VMEM
                # resident; single buffer saves a whole extra weight copy.
                pl.BlockSpec((K, P), lambda i: (0, 0),
                             pipeline_mode=pl.Buffered(1)),
                pl.BlockSpec((1, P), lambda i: (0, 0),
                             pipeline_mode=pl.Buffered(1)),
            ],
            out_specs=pl.BlockSpec((tm, P), lambda i: (i, 0)),
        ),
        compiler_params=pltpu.CompilerParams(
            # Independent M tiles.
            # TODO(synk): if profiling on v7x shows the M grid is not sharded
            # across both TensorCores, switch to pltpu.CORE_PARALLEL / core_map.
            dimension_semantics=("parallel",),
            vmem_limit_bytes=32 << 20,  # headroom; < v7x 64 MiB physical VMEM
        ),
        cost_estimate=cost,
    )(x2d, weight, b2d)

    return out2d.reshape(B, N, P)


if __name__ == "__main__":
    # Small synthetic config consistent with the module:
    #   vision_config.hidden_size = 32, projection_dim = 128 (lane-aligned),
    #   batch = 2, num_patches = 16 (and a non-tile-aligned 13 to exercise the
    #   ragged last tile path).
    key = jax.random.PRNGKey(0)
    k_x, k_w, k_b, k_x2 = jax.random.split(key, 4)

    K, P = 32, 128
    # Hoisted one-time parameter casts: weight stored bf16, bias f32.
    w_f32 = jax.random.normal(k_w, (K, P), dtype=jnp.float32) * 0.02
    weight = w_f32.astype(jnp.bfloat16)
    bias = jax.random.normal(k_b, (P,), dtype=jnp.float32) * 0.02

    ok = True
    for kx, (B, N) in ((k_x, (2, 16)), (k_x2, (2, 13))):
        image_features = jax.random.normal(kx, (B, N, K), dtype=jnp.float32)
        out = paligemma_multimodal_projector(image_features, weight, bias)
        out = jax.block_until_ready(out)

        # Reference (nn.Linear forward) with the same bf16-quantized weights;
        # bf16 MXU inputs / bf16 output need a slightly looser tolerance.
        ref = image_features @ weight.astype(jnp.float32) + bias
        ok &= out.shape == (B, N, P)
        ok &= out.dtype == jnp.bfloat16
        ok &= bool(jnp.allclose(out.astype(jnp.float32), ref,
                                atol=1e-2, rtol=5e-2))

    assert ok
    print("KERNEL_OK")
</pallas_src>

<mosaic_0001>
module attributes {stable_mosaic.version = 11 : i64} {
  func.func @_projector_kernel(%arg0: i32, %arg1: memref<32x32xf32, #tpu.memory_space<vmem>>, %arg2: memref<32x128xbf16, #tpu.memory_space<vmem>>, %arg3: memref<1x128xf32, #tpu.memory_space<vmem>>, %arg4: memref<32x128xbf16, #tpu.memory_space<vmem>>) attributes {dimension_semantics = [#tpu.dimension_semantics<parallel>], iteration_bounds = array<i64: 1>, scalar_prefetch = 0 : i64, scratch_operands = 0 : i64, tpu.core_type = #tpu.core_type<tc>, window_params = [{transform_indices = @transform_0, window_bounds = array<i64: 32, 32>}, {pipeline_mode = #tpu.pipeline_mode<synchronous>, transform_indices = @transform_1, window_bounds = array<i64: 32, 128>}, {pipeline_mode = #tpu.pipeline_mode<synchronous>, transform_indices = @transform_2, window_bounds = array<i64: 1, 128>}, {transform_indices = @transform_3, window_bounds = array<i64: 32, 128>}]} {
    %c0 = arith.constant 0 : index
    %c0_0 = arith.constant 0 : index
    %0 = vector.load %arg1[%c0, %c0_0] : memref<32x32xf32, #tpu.memory_space<vmem>>, vector<32x32xf32>
    %1 = arith.truncf %0 : vector<32x32xf32> to vector<32x32xbf16>
    %c0_1 = arith.constant 0 : index
    %c0_2 = arith.constant 0 : index
    %2 = vector.load %arg2[%c0_1, %c0_2] : memref<32x128xbf16, #tpu.memory_space<vmem>>, vector<32x128xbf16>
    %cst = arith.constant dense<0.000000e+00> : vector<32x128xf32>
    %3 = tpu.matmul %1, %2, %cst {dimension_numbers = #tpu.dot_dimension_numbers<[1], [0], [0], [1], [0, 0, 1, 1], [], []>} : vector<32x32xbf16>, vector<32x128xbf16>, vector<32x128xf32> -> vector<32x128xf32>
    %c0_3 = arith.constant 0 : index
    %c0_4 = arith.constant 0 : index
    %4 = vector.load %arg3[%c0_3, %c0_4] : memref<1x128xf32, #tpu.memory_space<vmem>>, vector<1x128xf32>
    %5 = vector.broadcast %4 : vector<1x128xf32> to vector<32x128xf32>
    %6 = arith.addf %3, %5 : vector<32x128xf32>
    %7 = arith.truncf %6 : vector<32x128xf32> to vector<32x128xbf16>
    %c0_5 = arith.constant 0 : index
    %c0_6 = arith.constant 0 : index
    %8 = vector.load %arg4[%c0_5, %c0_6] : memref<32x128xbf16, #tpu.memory_space<vmem>>, vector<32x128xbf16>
    tpu.vector_store %arg4[%c0_5, %c0_6], %7 {strides = array<i32>} : memref<32x128xbf16, #tpu.memory_space<vmem>>, vector<32x128xbf16>,
    return
  }
  func.func @transform_0(%arg0: i32) -> (i32, i32) {
    %c0_i32 = arith.constant 0 : i32
    %c0_i32_0 = arith.constant 0 : i32
    return %arg0, %c0_i32 : i32, i32
  }
  func.func @transform_1(%arg0: i32) -> (i32, i32) {
    %c0_i32 = arith.constant 0 : i32
    %c0_i32_0 = arith.constant 0 : i32
    %c0_i32_1 = arith.constant 0 : i32
    return %c0_i32, %c0_i32_0 : i32, i32
  }
  func.func @transform_2(%arg0: i32) -> (i32, i32) {
    %c0_i32 = arith.constant 0 : i32
    %c0_i32_0 = arith.constant 0 : i32
    %c0_i32_1 = arith.constant 0 : i32
    return %c0_i32, %c0_i32_0 : i32, i32
  }
  func.func @transform_3(%arg0: i32) -> (i32, i32) {
    %c0_i32 = arith.constant 0 : i32
    %c0_i32_0 = arith.constant 0 : i32
    return %arg0, %c0_i32 : i32, i32
  }
}

</mosaic_0001>

<llo_original>
// kernel: tpu_custom_call.1
$region0: #{tpu_custom_call.1}
  #allocation0 [shape = 'u32[]', space=smem, size = 0x4, offset = 0x4, fixed_abs, tag = 'smem constant byte address 0x4 - core index']
  #allocation1 [shape = 'u32[144,128]{1,0:T(1,128)}', space=vmem, size = 0x12000, scoped, tag = 'internal scratch']
  %s0 = inlined_call_operand.hbm [shape: f32[32,32], index: 0, kind: input, shape index: {}]
  %s1 = inlined_call_operand.hbm [shape: bf16[32,128], index: 1, kind: input, shape index: {}]
  %s2 = inlined_call_operand.vmem [shape: f32[1,128], index: 2, kind: input, shape index: {}]
  %s3 = inlined_call_operand.hbm [shape: bf16[32,128], index: 3, kind: output, shape index: {}]
  %s4 = sld [smem:[#allocation0]]
  $region30: #{tpu_custom_call.1} parent=0
    _
  %s6 = ssub.s32 1, %s4
  %s7 = scalar_select 0, %s6, %s4
  $region1: #{tpu_custom_call.1} parent=0
    #allocation2 [shape = 'u8[16384]{0}', space=vmem, size = 0x4000, scoped, tag = 'input window, operand 0, single buffered']
    #allocation3 [shape = 's32[1]{0}', space=sflag, size = 0x4, scoped, tag = 'scoped memory for tpu_custom_call.1']
    #allocation4 [shape = 's32[1]{0}', space=sflag, size = 0x4, scoped, tag = 'scoped memory for tpu_custom_call.1']
    #allocation5 [shape = 'u8[8192]{0}', space=vmem, size = 0x2000, scoped, tag = 'input window, operand 1, single buffered']
    #allocation6 [shape = 's32[1]{0}', space=sflag, size = 0x4, scoped, tag = 'scoped memory for tpu_custom_call.1']
    #allocation7 [shape = 'u8[8192]{0}', space=vmem, size = 0x2000, scoped, tag = 'output window, operand 0, single buffered']
    %8 = vsyncpa [#allocation3], 0
    %9 = vsyncpa [#allocation6], 0
    %10 = vsyncpa [#allocation4], 0
    // Predicated region
    $region2: #{tpu_custom_call.1} parent=1 // pred_check
      _
    $region3: #{tpu_custom_call.1} parent=1 // pred_check_branch
      %12 = sbr.rel (0) target = $region5
    $region4: #{tpu_custom_call.1} parent=1 // pred_region
      %s14 = ssub.s32 512, 512
      %15 = vsyncadd [#allocation3], %s14
      %s16 = sshll.u32 [#allocation2], 4
      %s17 = int_to_ptr.vmem [resolvable:$true] %s16
      %22 = dma.hbm_to_vmem [thread:$0]  %s0, 512, %s17, [#allocation3], 128, 128, 8
    $region5: #{tpu_custom_call.1} parent=1 // pred_fallthru
      _
    // Predicated region
    $region6: #{tpu_custom_call.1} parent=1 // pred_check
      _
    $region7: #{tpu_custom_call.1} parent=1 // pred_check_branch
      %24 = sbr.rel (0) target = $region9
    $region8: #{tpu_custom_call.1} parent=1 // pred_region
      %s26 = ssub.s32 256, 256
      %27 = vsyncadd [#allocation6], %s26
      %s28 = sshll.u32 [#allocation5], 4
      %s29 = int_to_ptr.vmem [resolvable:$true] %s28
      %34 = dma.hbm_to_vmem [thread:$0]  %s1, 256, %s29, [#allocation6], 64, 64, 4
    $region9: #{tpu_custom_call.1} parent=1 // pred_fallthru
      _
    // Predicated region
    $region10: #{tpu_custom_call.1} parent=1 // pred_check
      _
    $region11: #{tpu_custom_call.1} parent=1 // pred_check_branch
      %36 = sbr.rel (0) target = $region13
    $region12: #{tpu_custom_call.1} parent=1 // pred_region
      _
    $region13: #{tpu_custom_call.1} parent=1 // pred_fallthru
      _
    // Predicated region
    $region14: #{tpu_custom_call.1} parent=1 // pred_check
      _
    $region15: #{tpu_custom_call.1} parent=1 // pred_check_branch
      %38 = sbr.rel (0) target = $region17
    $region16: #{tpu_custom_call.1} parent=1 // pred_region
      %39 = dma.done [#allocation3], 512
    $region17: #{tpu_custom_call.1} parent=1 // pred_fallthru
      _
    // Predicated region
    $region18: #{tpu_custom_call.1} parent=1 // pred_check
      _
    $region19: #{tpu_custom_call.1} parent=1 // pred_check_branch
      %41 = sbr.rel (0) target = $region21
    $region20: #{tpu_custom_call.1} parent=1 // pred_region
      %42 = dma.done [#allocation6], 256
    $region21: #{tpu_custom_call.1} parent=1 // pred_fallthru
      _
    %v44 = vld [vmem:[#allocation2] sm:$0xff]
    %v45 = vld [vmem:[#allocation2 + $0x8] sm:$0xff]
    %v46 = vld [vmem:[#allocation2 + $0x10] sm:$0xff]
    %v47 = vld [vmem:[#allocation2 + $0x18] sm:$0xff]
    %v48 = vpack.c.bf16 %v45, %v44
    %v49 = vpack.c.bf16 %v47, %v46
    %v50 = vld [vmem:[#allocation5] sm:$0xf]
    %v51 = vld [vmem:[#allocation5 + $0x4] sm:$0xf]
    %v52 = vld [vmem:[#allocation5 + $0x8] sm:$0xf]
    %v53 = vld [vmem:[#allocation5 + $0xc] sm:$0xf]
    %v54 = vld [vmem:[%s2] sm:$0x1]
    %v56 = vlaneseq
    %v57 = vshrl.u32 %v56, 7
    %v58 = vsub.s32 0, %v57
    %v59 = vrot.slane %v54, %v58
    %v65 = vunpack.c.l.b16 %v50
    %v66 = vunpack.c.l.b16 %v51
    %v67 = vunpack.c.l.b16 %v52
    %v68 = vunpack.c.l.b16 %v53
    %v69 = vpack.c.b16 %v66, %v65
    %v70 = vpack.c.b16 %v68, %v67
    %vm73 = vcmask 261120
    %v75 = vsel %vm73, %v48, 0
    %v78 = vsel %vm73, %v49, 0
    %80 = vmatprep.subr.bf16.mxu0 0
    %81 = vmatpush1.bf16.msra.mxu0 %v69
    %82 = vmatprep.subr.bf16.mxu0 0
    %83 = vmatpush1.bf16.msra.mxu0 %v70
    %84 = vmatprep.subr.bf16.mxu0 0
    %85 = vmatpush1.bf16.msra.mxu0 0
    %86 = vmatprep.subr.bf16.mxu0 0
    %87 = vmatpush1.bf16.msra.mxu0 0
    %88 = vmatprep.subr.bf16.mxu0 0
    %89 = vmatpush1.bf16.msra.mxu0 0
    %90 = vmatprep.subr.bf16.mxu0 0
    %91 = vmatpush1.bf16.msra.mxu0 0
    %92 = vmatprep.subr.bf16.mxu0 0
    %93 = vmatpush1.bf16.msra.mxu0 0
    %94 = vmatprep.subr.bf16.mxu0 0
    %95 = vmatpush1.bf16.msra.mxu0 0
    %96 = vmatprep.subr.bf16.mxu0 0
    %97 = vmatpush1.bf16.msra.mxu0 0
    %98 = vmatprep.subr.bf16.mxu0 0
    %99 = vmatpush1.bf16.msra.mxu0 0
    %100 = vmatprep.subr.bf16.mxu0 0
    %101 = vmatpush1.bf16.msra.mxu0 0
    %102 = vmatprep.subr.bf16.mxu0 0
    %103 = vmatpush1.bf16.msra.mxu0 0
    %104 = vmatprep.subr.bf16.mxu0 0
    %105 = vmatpush1.bf16.msra.mxu0 0
    %106 = vmatprep.subr.bf16.mxu0 0
    %107 = vmatpush1.bf16.msra.mxu0 0
    %108 = vmatprep.subr.bf16.mxu0 0
    %109 = vmatpush1.bf16.msra.mxu0 0
    %110 = vmatprep.subr.bf16.mxu0 0
    %111 = vmatpush1.bf16.msra.mxu0 0
    %112 = vmatprep.mubr.bf16.mxu0 0
    %113 = vmatmul.mubr.bf16.gmra.mrb[0].mxu0 %v75
    %v114 = vpop.f32.mrb[0].mxu0
    %v115 = vadd.f32 %v59, %v114
    %v116 = vpop.f32.mrb[0].mxu0
    %v117 = vpop.f32.mrb[0].mxu0
    %v118 = vadd.f32 %v59, %v117
    %v119 = vpop.f32.mrb[0].mxu0
    %120 = vmatprep.mubr.bf16.mxu0 0
    %121 = vmatmul.mubr.bf16.gmra.mrb[0].mxu0 %v78
    %v122 = vpop.f32.mrb[0].mxu0
    %v123 = vadd.f32 %v59, %v122
    %v124 = vpop.f32.mrb[0].mxu0
    %v125 = vpop.f32.mrb[0].mxu0
    %v126 = vadd.f32 %v59, %v125
    %v127 = vpop.f32.mrb[0].mxu0
    %128 = vdwg.mxu0
    %v129 = vpack.c.bf16 %v118, %v115
    %v130 = vpack.c.bf16 %v126, %v123
    %v133 = vunpack.c.l.b16 %v129
    %v134 = vunpack.c.h.b16 %v129
    %v135 = vunpack.c.l.b16 %v130
    %v136 = vunpack.c.h.b16 %v130
    %v137 = vpack.c.b16 %v133, %v133
    %v138 = vpack.c.b16 %v134, %v134
    %v139 = vpack.c.b16 %v135, %v135
    %v140 = vpack.c.b16 %v136, %v136
    %145 = vst [vmem:[#allocation7] sm:$0xf] %v137
    %146 = vst [vmem:[#allocation7 + $0x4] sm:$0xf] %v138
    %147 = vst [vmem:[#allocation7 + $0x8] sm:$0xf] %v139
    %148 = vst [vmem:[#allocation7 + $0xc] sm:$0xf] %v140
    // Predicated region
    $region22: #{tpu_custom_call.1} parent=1 // pred_check
      _
    $region23: #{tpu_custom_call.1} parent=1 // pred_check_branch
      %150 = sbr.rel (0) target = $region25
    $region24: #{tpu_custom_call.1} parent=1 // pred_region
      %s152 = ssub.s32 256, 256
      %153 = vsyncadd [#allocation4], %s152
      %s154 = sshll.u32 [#allocation7], 4
      %s155 = int_to_ptr.vmem [resolvable:$true] %s154
      %160 = dma.vmem_to_hbm [thread:$0]  %s155, 256, %s3, [#allocation4], 64, 64, 4
    $region25: #{tpu_custom_call.1} parent=1 // pred_fallthru
      _
    // Predicated region
    $region26: #{tpu_custom_call.1} parent=1 // pred_check
      _
    $region27: #{tpu_custom_call.1} parent=1 // pred_check_branch
      %162 = sbr.rel (0) target = $region29
    $region28: #{tpu_custom_call.1} parent=1 // pred_region
      %163 = dma.done [#allocation4], 256
    $region29: #{tpu_custom_call.1} parent=1 // pred_fallthru
      _
    %164 = vsyncpa [#allocation3], 1
    %165 = vsyncpa [#allocation6], 1
    %166 = vsyncpa [#allocation4], 1

</llo_original>
